<compile_context>
chip_gen: v7x
topology: tpu7x:2x2x1
jax: 0.10.0
libtpu: 0.0.40
codegen_flags: <defaults>
</compile_context>

<pallas_src>
import functools

import jax
import jax.numpy as jnp
from jax.experimental import pallas as pl
from jax.experimental.pallas import tpu as pltpu

_UINT32_SPAN = 2 ** 32
_LANE = 128


# --------------------------------------------------------------------------- kernels
def _dropout_hw_prng_kernel(seed_ref, x_ref, o_ref, *, threshold: int, scale: float):
    """Inverted dropout using the TPU hardware PRNG (no extra HBM traffic for the mask)."""
    # Mix the base seed with both tile coordinates so every tile (and nearby base seeds)
    # gets an independent stream.
    pltpu.prng_seed(seed_ref[0], pl.program_id(0), pl.program_id(1))
    bits = pltpu.bitcast(pltpu.prng_random_bits(x_ref.shape), jnp.uint32)
    x = x_ref[...]
    keep = bits >= jnp.uint32(threshold)           # P(keep) = 1 - p
    scaled = x * jnp.asarray(scale, x.dtype)       # stay in input dtype (bf16-friendly)
    o_ref[...] = jnp.where(keep, scaled, jnp.zeros_like(scaled))


def _dropout_bits_kernel(x_ref, bits_ref, o_ref, *, threshold: int, scale: float):
    """Inverted dropout with host-generated random bits (portable / interpret fallback)."""
    x = x_ref[...]
    keep = bits_ref[...] >= jnp.uint32(threshold)
    scaled = x * jnp.asarray(scale, x.dtype)
    o_ref[...] = jnp.where(keep, scaled, jnp.zeros_like(scaled))


# --------------------------------------------------------------------------- tiling helpers
def _round_down(x: int, m: int) -> int:
    return (x // m) * m


def _sublane_multiple(dtype) -> int:
    """Dtype-specific sublane packing multiple: 8 (f32), 16 (bf16/f16), 32 (int8/fp8)."""
    itemsize = jnp.dtype(dtype).itemsize
    if itemsize >= 4:
        return 8
    if itemsize == 2:
        return 16
    return 32


def _chip_tile_target():
    """(per-buffer tile byte target, vmem_limit_bytes or None) for this TPU generation."""
    try:
        kind = jax.devices()[0].device_kind.lower()
    except Exception:
        kind = ""
    if "v7" in kind:
        # v7x: 64 MiB physical VMEM / 32 MiB scoped default. 2 MiB tiles already sit on the
        # HBM-roofline knee; do not inflate the double-buffered working set.
        return 2 << 20, None
    # v5e / v6e: 128 MiB physical VMEM. Bigger tiles amortize the ~0.35 us per-step overhead;
    # the v5e scoped default is only 16 MiB, so raise the limit explicitly.
    return 4 << 20, 64 << 20


def _tile_sizes(b: int, d: int, per_elem_bytes: int, target_bytes: int, sublane: int):
    """Pick a lane-dense (tb, td) block of roughly `target_bytes` per buffer.

    Respects the (8, 128) block constraint (tb a multiple of the sublane packing factor or
    == b; td a multiple of 128 or == d), and enforces a minimum number of grid tiles so both
    v7x TensorCores get work and medium inputs still software-pipeline.
    """
    lane = _LANE
    # Embedding-axis tile: whole d if affordable at the minimum row count, else the largest
    # 128-multiple that fits the byte target.
    if d % lane == 0 and d > lane:
        max_td = max(lane, _round_down(target_bytes // (sublane * per_elem_bytes), lane))
        td = min(d, max_td)
    else:
        td = d
    # Row-axis tile: fill the byte target.
    row_target = max(1, target_bytes // max(1, td * per_elem_bytes))
    if b <= sublane:
        tb = b
    else:
        tb = max(sublane, _round_down(row_target, sublane))
        tb = min(tb, b)  # either a multiple of `sublane`, or the full dim b (both legal)

    # Minimum tile count: >= 2 so both v7x TensorCores stream, >= 4 so the pipeline overlaps.
    total_bytes = b * d * per_elem_bytes
    min_tiles = 1
    if total_bytes > (1 << 20):
        min_tiles = 2
    if total_bytes > (4 << 20):
        min_tiles = 4

    def n_tiles(tb_, td_):
        return pl.cdiv(b, tb_) * pl.cdiv(d, td_)

    while n_tiles(tb, td) < min_tiles:
        if tb > sublane:
            tb = max(sublane, _round_down(tb // 2, sublane))
        elif td > lane and d % lane == 0:
            td = max(lane, _round_down(td // 2, lane))
        else:
            break
    return tb, td


# --------------------------------------------------------------------------- forward
def encoder_head_forward(input_vectors: jax.Array,
                         dropout: float = 0.0,
                         seed=0,
                         *,
                         interpret: bool = False) -> jax.Array:
    """EncoderHead.forward: transform(dropout(x)) with an identity `transform` stand-in.

    Args:
      input_vectors: (batch, input_embedding_size) embeddings.
      dropout: dropout probability (train-mode inverted dropout if > 0). Supported range is
        roughly [1e-9, 1 - 1e-9]; outside that the uint32 threshold saturates.
      seed: PRNG seed for the dropout mask. May be a Python int or a device int32 scalar
        (passing a device scalar avoids a host->device transfer per call).
      interpret: run the Pallas kernel in interpret mode (uses the portable bits fallback,
        since the hardware PRNG cannot be interpreted).

    Note: the mask is a function of (seed, tile coordinates), so it is reproducible for a
    fixed tiling but not across different tile-size choices / TPU generations.
    """
    if input_vectors.ndim != 2:
        raise ValueError("input_vectors must be (batch, input_embedding_size)")
    p = float(dropout)

    # TODO(synk): `EncoderHead.transform` is abstract (NotImplementedError); identity stand-in.
    if p <= 0.0:
        # torch.nn.Identity path: no kernel launch, no HBM traffic.
        return input_vectors
    if p >= 1.0:
        return jnp.zeros_like(input_vectors)

    orig_shape = input_vectors.shape
    b, d = orig_shape
    dtype = input_vectors.dtype
    itemsize = jnp.dtype(dtype).itemsize

    # Lane-dense flattening: dropout is elementwise, so remapping elements to different tiles
    # is legal. A last dim below / not a multiple of 128 lowers to masked partial stores;
    # reshape (free for contiguous row-major data) to a 128-multiple-wide slab instead.
    x = input_vectors
    if d % _LANE != 0:
        n = b * d
        for width in (512, 256, _LANE):
            if n % width == 0:
                x = input_vectors.reshape(n // width, width)
                break
    wb, wd = x.shape

    threshold = max(1, min(int(round(p * _UINT32_SPAN)), _UINT32_SPAN - 1))
    scale = 1.0 / (1.0 - p)

    use_hw_prng = (not interpret) and jax.default_backend() == "tpu"
    sublane = _sublane_multiple(dtype)
    target_bytes, vmem_limit = _chip_tile_target()
    extra = 0 if use_hw_prng else jnp.dtype(jnp.uint32).itemsize
    tb, td = _tile_sizes(wb, wd, itemsize + extra, target_bytes, sublane)
    grid = (pl.cdiv(wb, tb), pl.cdiv(wd, td))
    block = (tb, td)

    compiler_params = pltpu.CompilerParams(
        dimension_semantics=("parallel", "parallel"),
        vmem_limit_bytes=vmem_limit)
    out_shape = jax.ShapeDtypeStruct((wb, wd), dtype)

    if use_hw_prng:
        seed_arr = jnp.asarray(seed, dtype=jnp.int32).reshape((1,))
        kernel = functools.partial(_dropout_hw_prng_kernel,
                                   threshold=threshold, scale=scale)
        grid_spec = pltpu.PrefetchScalarGridSpec(
            num_scalar_prefetch=1,
            grid=grid,
            in_specs=[pl.BlockSpec(block, lambda i, j, seed_ref: (i, j))],
            out_specs=pl.BlockSpec(block, lambda i, j, seed_ref: (i, j)),
        )
        out = pl.pallas_call(
            kernel,
            out_shape=out_shape,
            grid_spec=grid_spec,
            compiler_params=compiler_params,
        )(seed_arr, x)
    else:
        # Portable fallback (no TPU hardware PRNG lowering, e.g. interpret mode / CPU):
        # host-generated random bits streamed through the same tiling + integer threshold.
        key = jax.random.PRNGKey(jnp.asarray(seed, dtype=jnp.int32).reshape(()))
        bits = jax.random.bits(key, (wb, wd), dtype=jnp.uint32)
        kernel = functools.partial(_dropout_bits_kernel,
                                   threshold=threshold, scale=scale)
        out = pl.pallas_call(
            kernel,
            out_shape=out_shape,
            grid=grid,
            in_specs=[pl.BlockSpec(block, lambda i, j: (i, j)),
                      pl.BlockSpec(block, lambda i, j: (i, j))],
            out_specs=pl.BlockSpec(block, lambda i, j: (i, j)),
            compiler_params=compiler_params,
            interpret=interpret,
        )(x, bits)

    return out.reshape(orig_shape)


# --------------------------------------------------------------------------- demo / checks
if __name__ == "__main__":
    key = jax.random.PRNGKey(0)
    batch, input_embedding_size = 8, 128
    x = jax.random.normal(key, (batch, input_embedding_size), dtype=jnp.float32)

    # Default module config: dropout = 0.0 -> Identity (no kernel launch, zero cost).
    out = jax.block_until_ready(encoder_head_forward(x, dropout=0.0))
    assert out.shape == (batch, input_embedding_size)
    assert jnp.allclose(out, x), "dropout=0.0 path must be identity"

    # Dropout hot path: runs the Pallas kernel (train-mode inverted dropout).
    out_drop = jax.block_until_ready(encoder_head_forward(x, dropout=0.5, seed=1234))
    assert out_drop.shape == (batch, input_embedding_size)
    nz = out_drop != 0
    # Surviving elements are scaled by 1/(1-p); dropped elements are exactly 0.
    assert jnp.allclose(jnp.where(nz, out_drop, 0.0),
                        jnp.where(nz, x * 2.0, 0.0), rtol=1e-5, atol=1e-5)
    frac_kept = float(jnp.mean(nz.astype(jnp.float32)))
    assert 0.2 < frac_kept < 0.8, f"unexpected keep fraction {frac_kept}"

    # Narrow / non-128-multiple embedding: exercises the lane-dense flattening path.
    x_narrow = jax.random.normal(jax.random.PRNGKey(1), (8, 96), dtype=jnp.float32)
    out_narrow = jax.block_until_ready(
        encoder_head_forward(x_narrow, dropout=0.25, seed=7))
    assert out_narrow.shape == x_narrow.shape
    nz2 = out_narrow != 0
    assert jnp.allclose(jnp.where(nz2, out_narrow, 0.0),
                        jnp.where(nz2, x_narrow / 0.75, 0.0), rtol=1e-5, atol=1e-5)

    print("KERNEL_OK")
</pallas_src>

<mosaic_0001>
module attributes {stable_mosaic.version = 11 : i64} {
  func.func @_dropout_bits_kernel(%arg0: i32, %arg1: i32, %arg2: memref<8x128xf32, #tpu.memory_space<vmem>>, %arg3: memref<8x128xi32, #tpu.memory_space<vmem>>, %arg4: memref<8x128xf32, #tpu.memory_space<vmem>>) attributes {dimension_semantics = [#tpu.dimension_semantics<parallel>, #tpu.dimension_semantics<parallel>], iteration_bounds = array<i64: 1, 1>, scalar_prefetch = 0 : i64, scratch_operands = 0 : i64, tpu.core_type = #tpu.core_type<tc>, window_params = [{transform_indices = @transform_0, window_bounds = array<i64: 8, 128>}, {transform_indices = @transform_1, window_bounds = array<i64: 8, 128>}, {transform_indices = @transform_2, window_bounds = array<i64: 8, 128>}]} {
    %c0 = arith.constant 0 : index
    %c0_0 = arith.constant 0 : index
    %0 = vector.load %arg2[%c0, %c0_0] : memref<8x128xf32, #tpu.memory_space<vmem>>, vector<8x128xf32>
    %c0_1 = arith.constant 0 : index
    %c0_2 = arith.constant 0 : index
    %1 = vector.load %arg3[%c0_1, %c0_2] : memref<8x128xi32, #tpu.memory_space<vmem>>, vector<8x128xi32>
    %c-2147483648_i32 = arith.constant -2147483648 : i32
    %2 = vector.broadcast %c-2147483648_i32 : i32 to vector<8x128xi32>
    %3 = arith.cmpi uge, %1, %2 : vector<8x128xi32>
    %cst = arith.constant 2.000000e+00 : f32
    %4 = vector.broadcast %cst : f32 to vector<8x128xf32>
    %5 = arith.mulf %0, %4 : vector<8x128xf32>
    %cst_3 = arith.constant 0.000000e+00 : f32
    %6 = vector.broadcast %cst_3 : f32 to vector<8x128xf32>
    %7 = arith.select %3, %5, %6 : vector<8x128xi1>, vector<8x128xf32>
    %c0_4 = arith.constant 0 : index
    %c0_5 = arith.constant 0 : index
    %8 = vector.load %arg4[%c0_4, %c0_5] : memref<8x128xf32, #tpu.memory_space<vmem>>, vector<8x128xf32>
    tpu.vector_store %arg4[%c0_4, %c0_5], %7 {strides = array<i32>} : memref<8x128xf32, #tpu.memory_space<vmem>>, vector<8x128xf32>,
    return
  }
  func.func @transform_0(%arg0: i32, %arg1: i32) -> (i32, i32) {
    %c0_i32 = arith.constant 0 : i32
    return %arg0, %arg1 : i32, i32
  }
  func.func @transform_1(%arg0: i32, %arg1: i32) -> (i32, i32) {
    %c0_i32 = arith.constant 0 : i32
    return %arg0, %arg1 : i32, i32
  }
  func.func @transform_2(%arg0: i32, %arg1: i32) -> (i32, i32) {
    %c0_i32 = arith.constant 0 : i32
    return %arg0, %arg1 : i32, i32
  }
}

</mosaic_0001>

<llo_original>
// kernel: tpu_custom_call.1
$region0: #{tpu_custom_call.1}
  #allocation0 [shape = 'u32[]', space=smem, size = 0x4, offset = 0x4, fixed_abs, tag = 'smem constant byte address 0x4 - core index']
  #allocation1 [shape = 'u32[144,128]{1,0:T(1,128)}', space=vmem, size = 0x12000, scoped, tag = 'internal scratch']
  %s0 = inlined_call_operand.hbm [shape: f32[8,128], index: 0, kind: input, shape index: {}]
  %s1 = inlined_call_operand.hbm [shape: u32[8,128], index: 1, kind: input, shape index: {}]
  %s2 = inlined_call_operand.hbm [shape: f32[8,128], index: 2, kind: output, shape index: {}]
  %s3 = sld [smem:[#allocation0]]
  $region26: #{tpu_custom_call.1} parent=0
    _
  %s5 = ssub.s32 1, %s3
  %s6 = scalar_select 0, %s5, %s3
  $region1: #{tpu_custom_call.1} parent=0
    #allocation2 [shape = 'u8[4096]{0}', space=vmem, size = 0x1000, scoped, tag = 'input window, operand 0, single buffered']
    #allocation3 [shape = 's32[1]{0}', space=sflag, size = 0x4, scoped, tag = 'scoped memory for tpu_custom_call.1']
    #allocation4 [shape = 's32[1]{0}', space=sflag, size = 0x4, scoped, tag = 'scoped memory for tpu_custom_call.1']
    #allocation5 [shape = 'u8[4096]{0}', space=vmem, size = 0x1000, scoped, tag = 'input window, operand 1, single buffered']
    #allocation6 [shape = 's32[1]{0}', space=sflag, size = 0x4, scoped, tag = 'scoped memory for tpu_custom_call.1']
    #allocation7 [shape = 'u8[4096]{0}', space=vmem, size = 0x1000, scoped, tag = 'output window, operand 0, single buffered']
    %7 = vsyncpa [#allocation3], 0
    %8 = vsyncpa [#allocation6], 0
    %9 = vsyncpa [#allocation4], 0
    // Predicated region
    $region2: #{tpu_custom_call.1} parent=1 // pred_check
      _
    $region3: #{tpu_custom_call.1} parent=1 // pred_check_branch
      %11 = sbr.rel (0) target = $region5
    $region4: #{tpu_custom_call.1} parent=1 // pred_region
      %s13 = ssub.s32 128, 128
      %14 = vsyncadd [#allocation3], %s13
      %s16 = sshll.u32 [#allocation2], 4
      %s17 = int_to_ptr.vmem [resolvable:$true] %s16
      %19 = dma.hbm_to_vmem [thread:$0]  %s0, 128, %s17, [#allocation3]
    $region5: #{tpu_custom_call.1} parent=1 // pred_fallthru
      _
    // Predicated region
    $region6: #{tpu_custom_call.1} parent=1 // pred_check
      _
    $region7: #{tpu_custom_call.1} parent=1 // pred_check_branch
      %21 = sbr.rel (0) target = $region9
    $region8: #{tpu_custom_call.1} parent=1 // pred_region
      %s23 = ssub.s32 128, 128
      %24 = vsyncadd [#allocation6], %s23
      %s26 = sshll.u32 [#allocation5], 4
      %s27 = int_to_ptr.vmem [resolvable:$true] %s26
      %29 = dma.hbm_to_vmem [thread:$0]  %s1, 128, %s27, [#allocation6]
    $region9: #{tpu_custom_call.1} parent=1 // pred_fallthru
      _
    // Predicated region
    $region10: #{tpu_custom_call.1} parent=1 // pred_check
      _
    $region11: #{tpu_custom_call.1} parent=1 // pred_check_branch
      %31 = sbr.rel (0) target = $region13
    $region12: #{tpu_custom_call.1} parent=1 // pred_region
      %32 = dma.done [#allocation3], 128
    $region13: #{tpu_custom_call.1} parent=1 // pred_fallthru
      _
    // Predicated region
    $region14: #{tpu_custom_call.1} parent=1 // pred_check
      _
    $region15: #{tpu_custom_call.1} parent=1 // pred_check_branch
      %34 = sbr.rel (0) target = $region17
    $region16: #{tpu_custom_call.1} parent=1 // pred_region
      %35 = dma.done [#allocation6], 128
    $region17: #{tpu_custom_call.1} parent=1 // pred_fallthru
      _
    %v36 = vld [vmem:[#allocation2] sm:$0xff]
    %v37 = vld [vmem:[#allocation5] sm:$0xff]
    %vm38 = vcmp.ge.u32.totalorder %v37, 2147483648
    %v39 = vmul.f32 %v36, 2.0
    %v40 = vsel %vm38, %v39, 0.0
    %41 = vst [vmem:[#allocation7] sm:$0xff] %v40
    // Predicated region
    $region18: #{tpu_custom_call.1} parent=1 // pred_check
      _
    $region19: #{tpu_custom_call.1} parent=1 // pred_check_branch
      %43 = sbr.rel (0) target = $region21
    $region20: #{tpu_custom_call.1} parent=1 // pred_region
      %s45 = ssub.s32 128, 128
      %46 = vsyncadd [#allocation4], %s45
      %s48 = sshll.u32 [#allocation7], 4
      %s49 = int_to_ptr.vmem [resolvable:$true] %s48
      %51 = dma.vmem_to_hbm [thread:$0]  %s49, 128, %s2, [#allocation4]
    $region21: #{tpu_custom_call.1} parent=1 // pred_fallthru
      _
    // Predicated region
    $region22: #{tpu_custom_call.1} parent=1 // pred_check
      _
    $region23: #{tpu_custom_call.1} parent=1 // pred_check_branch
      %53 = sbr.rel (0) target = $region25
    $region24: #{tpu_custom_call.1} parent=1 // pred_region
      %54 = dma.done [#allocation4], 128
    $region25: #{tpu_custom_call.1} parent=1 // pred_fallthru
      _
    %55 = vsyncpa [#allocation3], 1
    %56 = vsyncpa [#allocation6], 1
    %57 = vsyncpa [#allocation4], 1

</llo_original>
